<compile_context>
chip_gen: v7x
topology: tpu7x:2x2x1
jax: 0.10.0
libtpu: 0.0.40
codegen_flags: <defaults>
</compile_context>

<pallas_src>
import functools

import numpy as np
import jax
import jax.numpy as jnp
from jax.experimental import pallas as pl
from jax.experimental.pallas import tpu as pltpu


# ---------------------------------------------------------------------------
# Deterministic, in-script "module config" (HKO-7 style).
# ---------------------------------------------------------------------------
RAIN_THRESHOLDS = [0.5, 2.0, 5.0, 10.0, 30.0]           # mm/h thresholds
CLASS_WEIGHTS = (1.0, 1.0, 2.0, 5.0, 10.0, 30.0)        # len = len(thresholds)+1
LAMBDA = 0.1                                            # temporal weighting slope

_TARGET_BLOCK_BYTES = 1 << 20                           # ~1 MiB logits block / step


def rainfall_to_pixel(rainfall, a=58.53, b=1.56):
    """Standard HKO-7 rainfall -> pixel-value conversion (Z-R relation)."""
    rainfall = np.asarray(rainfall, dtype=np.float64)
    dBR = np.log10(rainfall) * 10.0
    dBZ = dBR * b + 10.0 * np.log10(a)
    return (dBZ + 10.0) / 70.0


# ---------------------------------------------------------------------------
# Tiling heuristic
# ---------------------------------------------------------------------------
def _choose_tiles(B, C, HW, itemsize, target_bytes):
    """Pick (b_blk, hw_tile): lane-dense chunks; fold batch for small problems."""
    # Lane tile: largest divisor of HW that is a multiple of 128 and fits budget.
    if HW % 128 == 0:
        max_lanes = max(128, (target_bytes // (C * itemsize)) // 128 * 128)
        if HW <= max_lanes:
            hw_tile = HW
        else:
            hw_tile = 128
            for cand in range(max_lanes, 127, -128):
                if HW % cand == 0:
                    hw_tile = cand
                    break
    else:
        # Odd spatial size: one full-width block (block dim == array dim is legal).
        hw_tile = HW

    # Batch fold: grow the batch block while the logits block stays small.
    # (Only triggers for small problems, where megacore sharding is moot anyway.)
    b_blk = 1
    for cand in range(2, B + 1):
        if B % cand == 0 and cand * C * hw_tile * itemsize <= target_bytes:
            b_blk = cand
    return b_blk, hw_tile


# ---------------------------------------------------------------------------
# Pallas kernel
# ---------------------------------------------------------------------------
def _wce_kernel(logits_ref, cls_ref, out_ref, *, class_weights, lam):
    s = pl.program_id(1)          # sequence index (OUT_LEN axis)
    h = pl.program_id(2)          # spatial chunk index

    # Zero the resident accumulator block at the first step of each batch-block.
    @pl.when(jnp.logical_and(s == 0, h == 0))
    def _():
        out_ref[...] = jnp.zeros_like(out_ref)

    logits = logits_ref[...].astype(jnp.float32)     # (Bb, C, T)
    cls = cls_ref[...].astype(jnp.int32)             # (Bb, 1, T); == C for masked pixels

    # log-sum-exp over the class (sublane) axis (XLU reduce + EUP exp/log).
    m = jnp.max(logits, axis=1, keepdims=True)                               # (Bb,1,T)
    lse = jnp.log(jnp.sum(jnp.exp(logits - m), axis=1, keepdims=True)) + m   # (Bb,1,T)

    # Fused gather: the true-class logit and the per-class weight share the
    # (cls == i) mask — no iota / onehot temporaries.  Masked-out pixels carry
    # the sentinel class C, which never matches, so their weight (and hence
    # contribution) is exactly zero — no separate mask load or multiply.
    picked = jnp.zeros_like(lse)
    cw = jnp.zeros_like(lse)
    for i, w in enumerate(class_weights):
        sel = (cls == i).astype(jnp.float32)                 # (Bb,1,T)
        picked = picked + logits[:, i:i + 1, :] * sel
        cw = cw + jnp.float32(w) * sel

    # Temporal (LAMBDA) weight for this sequence step (scalar, applied after the
    # cheap leading-dim reduce).
    lam_w = jnp.float32(1.0) + jnp.float32(lam) * s.astype(jnp.float32)

    contrib = (lse - picked) * cw                            # weighted NLL, (Bb,1,T)
    # Only a cheap leading-dim (vreg) reduce per step; the expensive cross-lane
    # reduce happens once, in the wrapper, on the tiny output array.
    out_ref[...] = out_ref[...] + jnp.sum(contrib, axis=0) * lam_w


# ---------------------------------------------------------------------------
# Wrapper
# ---------------------------------------------------------------------------
def weighted_cross_entropy_loss(logits, target, mask, *,
                                rain_thresholds=RAIN_THRESHOLDS,
                                class_weights=CLASS_WEIGHTS,
                                lam=LAMBDA,
                                target_block_bytes=_TARGET_BLOCK_BYTES):
    """logits: (S, B, C, H, W); target/mask: (S, B, 1, H, W). Returns scalar."""
    # TODO(synk): the cfg.HKO.BENCHMARK.OUT_LEN shape assert of the original
    # module is config-external and omitted here.
    S, B, C, H, W = logits.shape
    HW = H * W
    total = S * B * H * W
    if class_weights is None:
        class_weights = (1.0,) * C
    if lam is None:
        lam = 0.0
    assert len(class_weights) == C, "need one class weight per logit channel"

    lg = logits.reshape(S, B, C, HW)

    # Precompute the class index exactly (f32 compares, same math as the
    # reference) and fuse the binary mask into it: masked-out pixels get the
    # sentinel class C, whose weight inside the kernel is 0.  Shipped as int8:
    # 1 B/pixel of aux HBM traffic.  NOTE: assumes the HKO mask is {0, 1}
    # (the original module also only ever sees binary masks).
    # (In a full model this conversion fuses with the upstream data producer.)
    thresholds = rainfall_to_pixel(rain_thresholds)      # ascending, excludes 0.0
    tgt = target.reshape(S, B, 1, HW).astype(jnp.float32)
    cls = jnp.zeros(tgt.shape, jnp.int32)
    for thr in thresholds:
        cls = cls + (tgt >= jnp.float32(thr)).astype(jnp.int32)
    msk_on = mask.reshape(S, B, 1, HW) > 0
    cls = jnp.where(msk_on, cls, jnp.int32(C)).astype(jnp.int8)

    itemsize = jnp.dtype(logits.dtype).itemsize
    b_blk, hw_tile = _choose_tiles(B, C, HW, itemsize, target_block_bytes)
    b_grid = B // b_blk
    n_hw = HW // hw_tile

    kernel = functools.partial(
        _wce_kernel,
        class_weights=tuple(float(w) for w in class_weights),
        lam=float(lam),
    )

    out = pl.pallas_call(
        kernel,
        out_shape=jax.ShapeDtypeStruct((b_grid, 1, hw_tile), jnp.float32),
        grid_spec=pltpu.PrefetchScalarGridSpec(
            num_scalar_prefetch=0,
            grid=(b_grid, S, n_hw),
            in_specs=[
                pl.BlockSpec((None, b_blk, C, hw_tile),
                             lambda bb, s, h: (s, bb, 0, h)),
                pl.BlockSpec((None, b_blk, 1, hw_tile),
                             lambda bb, s, h: (s, bb, 0, h)),
            ],
            # One lane-dense partial-sum row per batch-block: resident across the
            # (s, hw) reduction axes, disjoint across the parallel batch axis.
            out_specs=pl.BlockSpec((None, 1, hw_tile),
                                   lambda bb, s, h: (bb, 0, 0)),
        ),
        compiler_params=pltpu.CompilerParams(
            dimension_semantics=("parallel", "arbitrary", "arbitrary"),
            vmem_limit_bytes=32 * 1024 * 1024),
    )(lg, cls)

    # Single cheap cross-lane reduction + mean normalisation.
    return jnp.sum(out) / jnp.float32(total)


# ---------------------------------------------------------------------------
# Pure-JAX reference (mirrors the PyTorch forward exactly)
# ---------------------------------------------------------------------------
def reference_loss(logits, target, mask):
    pixel_thresholds = [0.0] + rainfall_to_pixel(RAIN_THRESHOLDS).tolist()
    x = jnp.transpose(logits, (1, 2, 0, 3, 4))          # (B, C, S, H, W)
    t = jnp.transpose(target, (1, 2, 0, 3, 4))[:, 0]    # (B, S, H, W)
    cls = jnp.zeros(t.shape, jnp.int32)
    for i, thr in enumerate(pixel_thresholds):
        cls = jnp.where(t >= thr, i, cls)
    logp = jax.nn.log_softmax(x, axis=1)
    picked = jnp.take_along_axis(logp, cls[:, None], axis=1)[:, 0]
    cw = jnp.asarray(CLASS_WEIGHTS, jnp.float32)[cls]
    err = -picked * cw                                   # (B, S, H, W)
    S = err.shape[1]
    w = 1.0 + LAMBDA * jnp.arange(S, dtype=jnp.float32)
    err = err * w[None, :, None, None]
    err = jnp.transpose(err, (1, 0, 2, 3))[:, :, None]   # (S, B, 1, H, W)
    return jnp.mean(err * mask.astype(jnp.float32))


if __name__ == "__main__":
    S, B, C, H, W = 4, 2, 6, 16, 16   # C = len(RAIN_THRESHOLDS) + 1
    key = jax.random.PRNGKey(0)
    k1, k2, k3 = jax.random.split(key, 3)
    logits = jax.random.normal(k1, (S, B, C, H, W), jnp.float32)
    target = jax.random.uniform(k2, (S, B, 1, H, W), jnp.float32)
    mask = (jax.random.uniform(k3, (S, B, 1, H, W)) > 0.3).astype(jnp.float32)

    ref = reference_loss(logits, target, mask)

    # Default tiling: batch folded into the block at this small size.
    loss = jax.block_until_ready(weighted_cross_entropy_loss(logits, target, mask))
    assert np.allclose(np.asarray(loss), np.asarray(ref), rtol=2e-5, atol=1e-6), (
        float(loss), float(ref))

    # Tiny block budget: exercises the multi-chunk / multi-batch-block /
    # parallel-axis path that production (480x480) sizes would take.
    loss2 = jax.block_until_ready(
        weighted_cross_entropy_loss(logits, target, mask, target_block_bytes=4096))
    assert np.allclose(np.asarray(loss2), np.asarray(ref), rtol=2e-5, atol=1e-6), (
        float(loss2), float(ref))

    print("KERNEL_OK")
</pallas_src>

<mosaic_0001>
module attributes {stable_mosaic.version = 11 : i64} {
  func.func @_wce_kernel(%arg0: i32, %arg1: i32, %arg2: i32, %arg3: memref<1x2x6x256xf32, #tpu.memory_space<vmem>>, %arg4: memref<1x2x1x256xi8, #tpu.memory_space<vmem>>, %arg5: memref<1x1x256xf32, #tpu.memory_space<vmem>>) attributes {dimension_semantics = [#tpu.dimension_semantics<parallel>, #tpu.dimension_semantics<arbitrary>, #tpu.dimension_semantics<arbitrary>], iteration_bounds = array<i64: 1, 4, 1>, scalar_prefetch = 0 : i64, scratch_operands = 0 : i64, tpu.core_type = #tpu.core_type<tc>, window_params = [{transform_indices = @transform_0, window_bounds = array<i64: 1, 2, 6, 256>}, {transform_indices = @transform_1, window_bounds = array<i64: 1, 2, 1, 256>}, {transform_indices = @transform_2, window_bounds = array<i64: 1, 1, 256>}]} {
    %c0_i32 = arith.constant 0 : i32
    %0 = arith.cmpi eq, %arg1, %c0_i32 : i32
    %c0_i32_0 = arith.constant 0 : i32
    %1 = arith.cmpi eq, %arg2, %c0_i32_0 : i32
    %2 = arith.andi %0, %1 : i1
    %3 = arith.extui %2 : i1 to i32
    %c0_i32_1 = arith.constant 0 : i32
    %4 = arith.cmpi ne, %3, %c0_i32_1 : i32
    scf.if %4 {
      %cst_28 = arith.constant 0.000000e+00 : f32
      %95 = vector.broadcast %cst_28 : f32 to vector<1x256xf32>
      %c0_29 = arith.constant 0 : index
      %c0_30 = arith.constant 0 : index
      %c0_31 = arith.constant 0 : index
      %96 = vector.load %arg5[%c0_29, %c0_30, %c0_31] : memref<1x1x256xf32, #tpu.memory_space<vmem>>, vector<1x1x256xf32>
      %97 = vector.shape_cast %96 : vector<1x1x256xf32> to vector<1x256xf32>
      %98 = vector.shape_cast %95 : vector<1x256xf32> to vector<1x1x256xf32>
      tpu.vector_store %arg5[%c0_29, %c0_30, %c0_31], %98 {strides = array<i32>} : memref<1x1x256xf32, #tpu.memory_space<vmem>>, vector<1x1x256xf32>,
    } else {
    }
    %c0 = arith.constant 0 : index
    %c0_2 = arith.constant 0 : index
    %c0_3 = arith.constant 0 : index
    %c0_4 = arith.constant 0 : index
    %5 = vector.load %arg3[%c0, %c0_2, %c0_3, %c0_4] : memref<1x2x6x256xf32, #tpu.memory_space<vmem>>, vector<1x2x6x256xf32>
    %6 = vector.shape_cast %5 : vector<1x2x6x256xf32> to vector<2x6x256xf32>
    %c0_5 = arith.constant 0 : index
    %c0_6 = arith.constant 0 : index
    %c0_7 = arith.constant 0 : index
    %c0_8 = arith.constant 0 : index
    %7 = vector.load %arg4[%c0_5, %c0_6, %c0_7, %c0_8] : memref<1x2x1x256xi8, #tpu.memory_space<vmem>>, vector<1x2x1x256xi8>
    %8 = vector.shape_cast %7 : vector<1x2x1x256xi8> to vector<2x1x256xi8>
    %9 = arith.extsi %8 : vector<2x1x256xi8> to vector<2x1x256xi32>
    %cst = arith.constant dense<0xFF800000> : vector<2x256xf32>
    %10 = vector.multi_reduction <maximumf>, %6, %cst [1] : vector<2x6x256xf32> to vector<2x256xf32>
    %11 = vector.shape_cast %10 : vector<2x256xf32> to vector<2x1x256xf32>
    %12 = vector.broadcast %11 : vector<2x1x256xf32> to vector<2x6x256xf32>
    %13 = arith.subf %6, %12 : vector<2x6x256xf32>
    %14 = math.exp %13 : vector<2x6x256xf32>
    %cst_9 = arith.constant dense<0.000000e+00> : vector<2x256xf32>
    %15 = vector.multi_reduction <add>, %14, %cst_9 [1] : vector<2x6x256xf32> to vector<2x256xf32>
    %16 = vector.shape_cast %15 : vector<2x256xf32> to vector<2x1x256xf32>
    %17 = math.log %16 : vector<2x1x256xf32>
    %18 = arith.addf %17, %11 : vector<2x1x256xf32>
    %cst_10 = arith.constant 0.000000e+00 : f32
    %19 = vector.broadcast %cst_10 : f32 to vector<2x1x256xf32>
    %cst_11 = arith.constant 0.000000e+00 : f32
    %20 = vector.broadcast %cst_11 : f32 to vector<2x1x256xf32>
    %c0_i32_12 = arith.constant 0 : i32
    %21 = vector.broadcast %c0_i32_12 : i32 to vector<2x1x256xi32>
    %22 = arith.cmpi eq, %9, %21 : vector<2x1x256xi32>
    %23 = arith.extui %22 : vector<2x1x256xi1> to vector<2x1x256xi32>
    %24 = arith.sitofp %23 : vector<2x1x256xi32> to vector<2x1x256xf32>
    %25 = vector.extract_strided_slice %6 {offsets = [0, 0, 0], sizes = [2, 1, 256], strides = [1, 1, 1]} : vector<2x6x256xf32> to vector<2x1x256xf32>
    %26 = arith.mulf %25, %24 : vector<2x1x256xf32>
    %27 = arith.addf %19, %26 : vector<2x1x256xf32>
    %cst_13 = arith.constant 1.000000e+00 : f32
    %28 = vector.broadcast %cst_13 : f32 to vector<2x1x256xf32>
    %29 = arith.mulf %28, %24 : vector<2x1x256xf32>
    %30 = arith.addf %20, %29 : vector<2x1x256xf32>
    %c1_i32 = arith.constant 1 : i32
    %31 = vector.broadcast %c1_i32 : i32 to vector<2x1x256xi32>
    %32 = arith.cmpi eq, %9, %31 : vector<2x1x256xi32>
    %33 = arith.extui %32 : vector<2x1x256xi1> to vector<2x1x256xi32>
    %34 = arith.sitofp %33 : vector<2x1x256xi32> to vector<2x1x256xf32>
    %35 = vector.extract_strided_slice %6 {offsets = [0, 1, 0], sizes = [2, 1, 256], strides = [1, 1, 1]} : vector<2x6x256xf32> to vector<2x1x256xf32>
    %36 = arith.mulf %35, %34 : vector<2x1x256xf32>
    %37 = arith.addf %27, %36 : vector<2x1x256xf32>
    %cst_14 = arith.constant 1.000000e+00 : f32
    %38 = vector.broadcast %cst_14 : f32 to vector<2x1x256xf32>
    %39 = arith.mulf %38, %34 : vector<2x1x256xf32>
    %40 = arith.addf %30, %39 : vector<2x1x256xf32>
    %c2_i32 = arith.constant 2 : i32
    %41 = vector.broadcast %c2_i32 : i32 to vector<2x1x256xi32>
    %42 = arith.cmpi eq, %9, %41 : vector<2x1x256xi32>
    %43 = arith.extui %42 : vector<2x1x256xi1> to vector<2x1x256xi32>
    %44 = arith.sitofp %43 : vector<2x1x256xi32> to vector<2x1x256xf32>
    %45 = vector.extract_strided_slice %6 {offsets = [0, 2, 0], sizes = [2, 1, 256], strides = [1, 1, 1]} : vector<2x6x256xf32> to vector<2x1x256xf32>
    %46 = arith.mulf %45, %44 : vector<2x1x256xf32>
    %47 = arith.addf %37, %46 : vector<2x1x256xf32>
    %cst_15 = arith.constant 2.000000e+00 : f32
    %48 = vector.broadcast %cst_15 : f32 to vector<2x1x256xf32>
    %49 = arith.mulf %48, %44 : vector<2x1x256xf32>
    %50 = arith.addf %40, %49 : vector<2x1x256xf32>
    %c3_i32 = arith.constant 3 : i32
    %51 = vector.broadcast %c3_i32 : i32 to vector<2x1x256xi32>
    %52 = arith.cmpi eq, %9, %51 : vector<2x1x256xi32>
    %53 = arith.extui %52 : vector<2x1x256xi1> to vector<2x1x256xi32>
    %54 = arith.sitofp %53 : vector<2x1x256xi32> to vector<2x1x256xf32>
    %55 = vector.extract_strided_slice %6 {offsets = [0, 3, 0], sizes = [2, 1, 256], strides = [1, 1, 1]} : vector<2x6x256xf32> to vector<2x1x256xf32>
    %56 = arith.mulf %55, %54 : vector<2x1x256xf32>
    %57 = arith.addf %47, %56 : vector<2x1x256xf32>
    %cst_16 = arith.constant 5.000000e+00 : f32
    %58 = vector.broadcast %cst_16 : f32 to vector<2x1x256xf32>
    %59 = arith.mulf %58, %54 : vector<2x1x256xf32>
    %60 = arith.addf %50, %59 : vector<2x1x256xf32>
    %c4_i32 = arith.constant 4 : i32
    %61 = vector.broadcast %c4_i32 : i32 to vector<2x1x256xi32>
    %62 = arith.cmpi eq, %9, %61 : vector<2x1x256xi32>
    %63 = arith.extui %62 : vector<2x1x256xi1> to vector<2x1x256xi32>
    %64 = arith.sitofp %63 : vector<2x1x256xi32> to vector<2x1x256xf32>
    %65 = vector.extract_strided_slice %6 {offsets = [0, 4, 0], sizes = [2, 1, 256], strides = [1, 1, 1]} : vector<2x6x256xf32> to vector<2x1x256xf32>
    %66 = arith.mulf %65, %64 : vector<2x1x256xf32>
    %67 = arith.addf %57, %66 : vector<2x1x256xf32>
    %cst_17 = arith.constant 1.000000e+01 : f32
    %68 = vector.broadcast %cst_17 : f32 to vector<2x1x256xf32>
    %69 = arith.mulf %68, %64 : vector<2x1x256xf32>
    %70 = arith.addf %60, %69 : vector<2x1x256xf32>
    %c5_i32 = arith.constant 5 : i32
    %71 = vector.broadcast %c5_i32 : i32 to vector<2x1x256xi32>
    %72 = arith.cmpi eq, %9, %71 : vector<2x1x256xi32>
    %73 = arith.extui %72 : vector<2x1x256xi1> to vector<2x1x256xi32>
    %74 = arith.sitofp %73 : vector<2x1x256xi32> to vector<2x1x256xf32>
    %75 = vector.extract_strided_slice %6 {offsets = [0, 5, 0], sizes = [2, 1, 256], strides = [1, 1, 1]} : vector<2x6x256xf32> to vector<2x1x256xf32>
    %76 = arith.mulf %75, %74 : vector<2x1x256xf32>
    %77 = arith.addf %67, %76 : vector<2x1x256xf32>
    %cst_18 = arith.constant 3.000000e+01 : f32
    %78 = vector.broadcast %cst_18 : f32 to vector<2x1x256xf32>
    %79 = arith.mulf %78, %74 : vector<2x1x256xf32>
    %80 = arith.addf %70, %79 : vector<2x1x256xf32>
    %81 = arith.sitofp %arg1 : i32 to f32
    %cst_19 = arith.constant 1.000000e-01 : f32
    %82 = arith.mulf %cst_19, %81 : f32
    %cst_20 = arith.constant 1.000000e+00 : f32
    %83 = arith.addf %cst_20, %82 : f32
    %84 = arith.subf %18, %77 : vector<2x1x256xf32>
    %85 = arith.mulf %84, %80 : vector<2x1x256xf32>
    %c0_21 = arith.constant 0 : index
    %c0_22 = arith.constant 0 : index
    %c0_23 = arith.constant 0 : index
    %86 = vector.load %arg5[%c0_21, %c0_22, %c0_23] : memref<1x1x256xf32, #tpu.memory_space<vmem>>, vector<1x1x256xf32>
    %87 = vector.shape_cast %86 : vector<1x1x256xf32> to vector<1x256xf32>
    %cst_24 = arith.constant dense<0.000000e+00> : vector<1x256xf32>
    %88 = vector.multi_reduction <add>, %85, %cst_24 [0] : vector<2x1x256xf32> to vector<1x256xf32>
    %89 = vector.broadcast %83 : f32 to vector<1x256xf32>
    %90 = arith.mulf %88, %89 : vector<1x256xf32>
    %91 = arith.addf %87, %90 : vector<1x256xf32>
    %c0_25 = arith.constant 0 : index
    %c0_26 = arith.constant 0 : index
    %c0_27 = arith.constant 0 : index
    %92 = vector.load %arg5[%c0_25, %c0_26, %c0_27] : memref<1x1x256xf32, #tpu.memory_space<vmem>>, vector<1x1x256xf32>
    %93 = vector.shape_cast %92 : vector<1x1x256xf32> to vector<1x256xf32>
    %94 = vector.shape_cast %91 : vector<1x256xf32> to vector<1x1x256xf32>
    tpu.vector_store %arg5[%c0_25, %c0_26, %c0_27], %94 {strides = array<i32>} : memref<1x1x256xf32, #tpu.memory_space<vmem>>, vector<1x1x256xf32>,
    return
  }
  func.func @transform_0(%arg0: i32, %arg1: i32, %arg2: i32) -> (i32, i32, i32, i32) {
    %c0_i32 = arith.constant 0 : i32
    %c0_i32_0 = arith.constant 0 : i32
    return %arg1, %arg0, %c0_i32, %arg2 : i32, i32, i32, i32
  }
  func.func @transform_1(%arg0: i32, %arg1: i32, %arg2: i32) -> (i32, i32, i32, i32) {
    %c0_i32 = arith.constant 0 : i32
    %c0_i32_0 = arith.constant 0 : i32
    return %arg1, %arg0, %c0_i32, %arg2 : i32, i32, i32, i32
  }
  func.func @transform_2(%arg0: i32, %arg1: i32, %arg2: i32) -> (i32, i32, i32) {
    %c0_i32 = arith.constant 0 : i32
    %c0_i32_0 = arith.constant 0 : i32
    %c0_i32_1 = arith.constant 0 : i32
    return %arg0, %c0_i32, %c0_i32_0 : i32, i32, i32
  }
}

</mosaic_0001>

<llo_original>
// kernel: tpu_custom_call.1
$region0: #{tpu_custom_call.1}
  #allocation0 [shape = 'u32[]', space=smem, size = 0x4, offset = 0x4, fixed_abs, tag = 'smem constant byte address 0x4 - core index']
  #allocation1 [shape = 'u32[144,128]{1,0:T(1,128)}', space=vmem, size = 0x12000, scoped, tag = 'internal scratch']
  %s0 = inlined_call_operand.vmem [shape: f32[4,2,6,256], index: 0, kind: input, shape index: {}]
  %s1 = inlined_call_operand.vmem [shape: s8[4,2,1,256], index: 1, kind: input, shape index: {}]
  %s2 = inlined_call_operand.hbm [shape: f32[1,1,256], index: 2, kind: output, shape index: {}]
  %s3 = sld [smem:[#allocation0]]
  $region45: #{tpu_custom_call.1} parent=0
    _
  %s5 = ssub.s32 1, %s3
  %s6 = scalar_select 0, %s5, %s3
  $region1: #{tpu_custom_call.1} parent=0
    #allocation2 [shape = 'u8[1024]{0}', space=vmem, size = 0x400, scoped, tag = 'output window, operand 0, single buffered']
    #allocation3 [shape = 's32[2]{0}', space=sflag, size = 0x8, scoped, tag = 'scoped memory for tpu_custom_call.1']
    %7 = vsyncpa [#allocation3], 0
    loop: start=0, step=1, limit=6
    $region2: #{tpu_custom_call.1} parent=1 // loop_pre_header
      _
    $region3: #{tpu_custom_call.1} parent=1 // loop_header
      %s9 = sphi 0, %s13
      %p10 = scmp.ge.s32.totalorder %s9, 6
      %s16 = sphi 0, %s35
      %s17 = sphi 0, %s31
      %s18 = sphi 0, %s27
      %s19 = sphi 0, %s16
      %s20 = sphi 0, %s17
      %s21 = sphi 0, %s18
      %s22 = sphi 0, %s19
      %s23 = sphi 0, %s20
      %s24 = sphi 0, %s21
      %s42 = sphi 0, %s44
      %s45 = sphi 0, %s42
      %s46 = sphi 0, %s45
      %s62 = sphi 0, %s46
      %s72 = sphi 0, %s74
      %s75 = sphi 0, %s72
      %s76 = sphi 0, %s75
      %s92 = sphi 0, %s76
      %s98 = sphi 0, %s100
      %s101 = sphi 0, %s98
      %s102 = sphi 0, %s101
      %s118 = sphi 0, %s102
    $region4: #{tpu_custom_call.1} parent=1 // loop_header_branch
      %12 = sbr.rel (%p10) target = $region8
    $region5: #{tpu_custom_call.1} parent=1 // loop_body
      %s14 = ssub.s32 %s9, 1
      %s15 = ssub.s32 %s9, 2
      %s25 = sadd.s32 1, %s18
      %p26 = scmp.ge.s32.totalorder %s25, 1
      %s27 = scalar_select %p26, 0, %s25
      %s28 = sadd.s32 1, %s17
      %s29 = scalar_select %p26, %s28, %s17
      %p30 = scmp.ge.s32.totalorder %s29, 4
      %s31 = scalar_select %p30, 0, %s29
      %s32 = sadd.s32 1, %s16
      %s33 = scalar_select %p30, %s32, %s16
      %p34 = scmp.ge.s32.totalorder %s33, 1
      %s35 = scalar_select %p34, 0, %s33
      %s36 = ssub.s32 %s17, %s31
      %s37 = ssub.s32 %s16, %s35
      %s38 = sor.u32 %s36, %s37
      %s39 = ssub.s32 %s18, %s27
      %s40 = sor.u32 %s38, %s39
      %p41 = scmp.eq.s32.totalorder %s40, 0
      %s43 = sadd.s32 %s42, 1
      %s44 = scalar_select %p41, %s42, %s43
      %p47 = pneg %p41
      %p48 = scmp.eq.s32.totalorder %s9, 3
      %p49 = por %p47, %p48
      %p50 = scmp.ne.s32.totalorder %s42, %s45
      %p51 = scmp.eq.s32.totalorder %s9, 0
      %p52 = por %p50, %p51
      %p53 = scmp.ne.s32.totalorder %s42, %s45
      %p54 = scmp.eq.s32.totalorder %s14, 3
      %p55 = por %p53, %p54
      %p56 = scmp.ne.s32.totalorder %s45, %s46
      %p57 = scmp.eq.s32.totalorder %s14, 0
      %p58 = por %p56, %p57
      %p59 = scmp.ne.s32.totalorder %s45, %s46
      %p60 = scmp.eq.s32.totalorder %s15, 3
      %p61 = por %p59, %p60
      %p63 = scmp.ne.s32.totalorder %s46, %s62
      %p64 = scmp.eq.s32.totalorder %s15, 0
      %p65 = por %p63, %p64
      %s66 = ssub.s32 %s17, %s31
      %s67 = ssub.s32 %s16, %s35
      %s68 = sor.u32 %s66, %s67
      %s69 = ssub.s32 %s18, %s27
      %s70 = sor.u32 %s68, %s69
      %p71 = scmp.eq.s32.totalorder %s70, 0
      %s73 = sadd.s32 %s72, 1
      %s74 = scalar_select %p71, %s72, %s73
      %p77 = pneg %p71
      %p78 = scmp.eq.s32.totalorder %s9, 3
      %p79 = por %p77, %p78
      %p80 = scmp.ne.s32.totalorder %s72, %s75
      %p81 = scmp.eq.s32.totalorder %s9, 0
      %p82 = por %p80, %p81
      %p83 = scmp.ne.s32.totalorder %s72, %s75
      %p84 = scmp.eq.s32.totalorder %s14, 3
      %p85 = por %p83, %p84
      %p86 = scmp.ne.s32.totalorder %s75, %s76
      %p87 = scmp.eq.s32.totalorder %s14, 0
      %p88 = por %p86, %p87
      %p89 = scmp.ne.s32.totalorder %s75, %s76
      %p90 = scmp.eq.s32.totalorder %s15, 3
      %p91 = por %p89, %p90
      %p93 = scmp.ne.s32.totalorder %s76, %s92
      %p94 = scmp.eq.s32.totalorder %s15, 0
      %p95 = por %p93, %p94
      %s96 = ssub.s32 %s16, %s35
      %p97 = scmp.eq.s32.totalorder %s96, 0
      %s99 = sadd.s32 %s98, 1
      %s100 = scalar_select %p97, %s98, %s99
      %p103 = pneg %p97
      %p104 = scmp.eq.s32.totalorder %s9, 3
      %p105 = por %p103, %p104
      %p106 = scmp.ne.s32.totalorder %s98, %s101
      %p107 = scmp.eq.s32.totalorder %s9, 0
      %p108 = por %p106, %p107
      %p109 = scmp.ne.s32.totalorder %s98, %s101
      %p110 = scmp.eq.s32.totalorder %s14, 3
      %p111 = por %p109, %p110
      %p112 = scmp.ne.s32.totalorder %s101, %s102
      %p113 = scmp.eq.s32.totalorder %s14, 0
      %p114 = por %p112, %p113
      %p115 = scmp.ne.s32.totalorder %s101, %s102
      %p116 = scmp.eq.s32.totalorder %s15, 3
      %p117 = por %p115, %p116
      %p119 = scmp.ne.s32.totalorder %s102, %s118
      %p120 = scmp.eq.s32.totalorder %s15, 0
      %p121 = por %p119, %p120
      %p122 = scmp.le.s32.totalorder 1, %s9
      %p123 = scmp.lt.s32.totalorder %s9, 5
      %p124 = pnand %p122, %p123
      %p125 = pneg %p124
      // Predicated region
      $region9: #{tpu_custom_call.1} parent=5 // pred_check
        _
      $region10: #{tpu_custom_call.1} parent=5 // pred_check_branch
        %127 = sbr.rel (%p124) target = $region12
      $region11: #{tpu_custom_call.1} parent=5 // pred_region
        %s128 = ssub.s32 %s9, 1
      $region12: #{tpu_custom_call.1} parent=5 // pred_fallthru
        _
      %p129 = scmp.lt.s32.totalorder %s9, 4
      // Predicated region
      $region13: #{tpu_custom_call.1} parent=5 // pred_check
        %p130 = pneg %p129
      $region14: #{tpu_custom_call.1} parent=5 // pred_check_branch
        %132 = sbr.rel (%p130) target = $region16
      $region15: #{tpu_custom_call.1} parent=5 // pred_region
        // Predicated region
        $region17: #{tpu_custom_call.1} parent=15 // pred_check
          %p133 = pneg %p52
        $region18: #{tpu_custom_call.1} parent=15 // pred_check_branch
          %135 = sbr.rel (%p133) target = $region20
        $region19: #{tpu_custom_call.1} parent=15 // pred_region
          %s136 = smul.u32 2, %s16
          %s137 = smul.u32 2, %s18
          %p138 = scmp.lt.s32.totalorder %s17, 3
          %s139 = scalar_select %p138, %s17, 3
          %p140 = scmp.lt.s32.totalorder %s136, 1
          %s141 = scalar_select %p140, %s136, 1
          %p142 = scmp.lt.s32.totalorder %s137, 1
          %s143 = scalar_select %p142, %s137, 1
          %s144 = smul.addr %s141, 2
          %s145 = sadd.s32 %s143, %s144
          %s146 = smul.addr %s139, 4
          %s147 = sadd.s32 %s145, %s146
          %s148 = smul.addr %s147, 8
          %s149 = scalar_lea.vmem %s0, %s148
          %s150 = smul.u32 2, %s16
          %s151 = smul.u32 2, %s18
        $region20: #{tpu_custom_call.1} parent=15 // pred_fallthru
          _
        // Predicated region
        $region21: #{tpu_custom_call.1} parent=15 // pred_check
          %p152 = pneg %p82
        $region22: #{tpu_custom_call.1} parent=15 // pred_check_branch
          %154 = sbr.rel (%p152) target = $region24
        $region23: #{tpu_custom_call.1} parent=15 // pred_region
          %s155 = smul.u32 2, %s16
          %s156 = smul.u32 2, %s18
          %p157 = scmp.lt.s32.totalorder %s17, 3
          %s158 = scalar_select %p157, %s17, 3
          %p159 = scmp.lt.s32.totalorder %s155, 1
          %s160 = scalar_select %p159, %s155, 1
          %p161 = scmp.lt.s32.totalorder %s156, 1
          %s162 = scalar_select %p161, %s156, 1
          %s163 = smul.addr %s160, 2
          %s164 = sadd.s32 %s162, %s163
          %s165 = smul.addr %s158, 4
          %s166 = sadd.s32 %s164, %s165
          %s167 = scalar_lea.vmem %s1, %s166
          %s168 = smul.u32 2, %s16
          %s169 = smul.u32 2, %s18
        $region24: #{tpu_custom_call.1} parent=15 // pred_fallthru
          _
      $region16: #{tpu_custom_call.1} parent=5 // pred_fallthru
        _
      %p170 = scmp.le.s32.totalorder 1, %s9
      %p171 = scmp.lt.s32.totalorder %s9, 5
      %p172 = pnand %p170, %p171
      %p173 = pneg %p172
      // Predicated region
      $region25: #{tpu_custom_call.1} parent=5 // pred_check
        _
      $region26: #{tpu_custom_call.1} parent=5 // pred_check_branch
        %175 = sbr.rel (%p172) target = $region28
      $region27: #{tpu_custom_call.1} parent=5 // pred_region
        %s176 = ssub.s32 %s9, 1
        %s177 = smul.u32 2, %s19
        %s178 = smul.u32 2, %s21
        %p179 = scmp.lt.s32.totalorder %s20, 3
        %s180 = scalar_select %p179, %s20, 3
        %p181 = scmp.lt.s32.totalorder %s177, 1
        %s182 = scalar_select %p181, %s177, 1
        %p183 = scmp.lt.s32.totalorder %s178, 1
        %s184 = scalar_select %p183, %s178, 1
        %s185 = smul.addr %s182, 2
        %s186 = sadd.s32 %s184, %s185
        %s187 = smul.addr %s180, 4
        %s188 = sadd.s32 %s186, %s187
        %s189 = smul.addr %s188, 8
        %s190 = scalar_lea.vmem %s0, %s189
        %p191 = pneg %p58
        %p192 = pneg %p55
        %s193 = smul.u32 2, %s19
        %s194 = smul.u32 2, %s21
        %p195 = scmp.lt.s32.totalorder %s20, 3
        %s196 = scalar_select %p195, %s20, 3
        %p197 = scmp.lt.s32.totalorder %s193, 1
        %s198 = scalar_select %p197, %s193, 1
        %p199 = scmp.lt.s32.totalorder %s194, 1
        %s200 = scalar_select %p199, %s194, 1
        %s201 = smul.addr %s198, 2
        %s202 = sadd.s32 %s200, %s201
        %s203 = smul.addr %s196, 4
        %s204 = sadd.s32 %s202, %s203
        %s205 = scalar_lea.vmem %s1, %s204
        %p206 = pneg %p88
        %p207 = pneg %p85
        %p208 = pneg %p114
        %p209 = pneg %p111
        %s210 = smul.u32 2, %s19
        %s211 = smul.u32 2, %s21
        %p212 = scmp.lt.s32.totalorder %s20, 3
        %s213 = scalar_select %p212, %s20, 3
        %p214 = scmp.lt.s32.totalorder %s210, 1
        %s215 = scalar_select %p214, %s210, 1
        %p216 = scmp.lt.s32.totalorder %s211, 1
        %s217 = scalar_select %p216, %s211, 1
        %s218 = smul.addr %s215, 2
        %s219 = sadd.s32 %s217, %s218
        %s220 = smul.addr %s213, 4
        %s221 = sadd.s32 %s219, %s220
        %s222 = smul.addr %s221, 8
        %s223 = scalar_lea.vmem %s0, %s222
        %s224 = smul.u32 2, %s19
        %s225 = smul.u32 2, %s21
        %s226 = smul.u32 2, %s19
        %s227 = smul.u32 2, %s21
        %p228 = scmp.lt.s32.totalorder %s20, 3
        %s229 = scalar_select %p228, %s20, 3
        %p230 = scmp.lt.s32.totalorder %s226, 1
        %s231 = scalar_select %p230, %s226, 1
        %p232 = scmp.lt.s32.totalorder %s227, 1
        %s233 = scalar_select %p232, %s227, 1
        %s234 = smul.addr %s231, 2
        %s235 = sadd.s32 %s233, %s234
        %s236 = smul.addr %s229, 4
        %s237 = sadd.s32 %s235, %s236
        %s238 = scalar_lea.vmem %s1, %s237
        %s239 = smul.u32 2, %s19
        %s240 = smul.u32 2, %s21
        %p241 = scmp.eq.s32.totalorder %s20, 0
        %p242 = scmp.eq.s32.totalorder %s21, 0
        %p243 = pnand %p241, %p242
        %p244 = pneg %p243
        // Predicated region
        $region29: #{tpu_custom_call.1} parent=27 // pred_check
          _
        $region30: #{tpu_custom_call.1} parent=27 // pred_check_branch
          %246 = sbr.rel (%p243) target = $region32
        $region31: #{tpu_custom_call.1} parent=27 // pred_region
          %v247 = vlaneseq
          %vm248 = vcmp.ge.s32.totalorder %v247, 0
          %vm249 = vcmp.lt.s32.totalorder %v247, 256
          %vm250 = vmand %vm248, %vm249
          %251 = vst.msk [vmem:[#allocation2] sm:$0x3] %vm250, 0.0
        $region32: #{tpu_custom_call.1} parent=27 // pred_fallthru
          _
        %v252 = vld [vmem:[%s223] sm:$0x3f]
        %v253 = vld [vmem:[%s223 + $0x8] sm:$0x3f]
        %v254 = vld [vmem:[%s223 + $0x10] sm:$0x3f]
        %v255 = vld [vmem:[%s223 + $0x18] sm:$0x3f]
        %v256 = vld [vmem:[%s238] sm:$0x3]
        %v257 = vld [vmem:[%s238 + $0x2] sm:$0x3]
        %v258 = vunpack.c.0.s8 %v256
        %v259 = vunpack.c.0.s8 %v257
        %vm260 = vcmask 1045504
        %v261 = vsel %vm260, %v252, -inf
        %v262 = vrot.slane %v261, 4
        %v263 = vmax.f32 %v261, %v262
        %v264 = vrot.slane %v263, 2
        %v265 = vmax.f32 %v263, %v264
        %v266 = vrot.slane %v265, 1
        %v267 = vmax.f32 %v265, %v266
        %v268 = vsel %vm260, %v253, -inf
        %v269 = vrot.slane %v268, 4
        %v270 = vmax.f32 %v268, %v269
        %v271 = vrot.slane %v270, 2
        %v272 = vmax.f32 %v270, %v271
        %v273 = vrot.slane %v272, 1
        %v274 = vmax.f32 %v272, %v273
        %v275 = vsel %vm260, %v254, -inf
        %v276 = vrot.slane %v275, 4
        %v277 = vmax.f32 %v275, %v276
        %v278 = vrot.slane %v277, 2
        %v279 = vmax.f32 %v277, %v278
        %v280 = vrot.slane %v279, 1
        %v281 = vmax.f32 %v279, %v280
        %v282 = vsel %vm260, %v255, -inf
        %v283 = vrot.slane %v282, 4
        %v284 = vmax.f32 %v282, %v283
        %v285 = vrot.slane %v284, 2
        %v286 = vmax.f32 %v284, %v285
        %v287 = vrot.slane %v286, 1
        %v288 = vmax.f32 %v286, %v287
        %v289 = vsub.f32 %v252, %v267
        %v290 = vsub.f32 %v253, %v274
        %v291 = vsub.f32 %v254, %v281
        %v292 = vsub.f32 %v255, %v288
        %v293 = vmul.f32 %v289, 1.442695
        %v294 = vpow.pop %v293
        %v295 = vmul.f32 %v290, 1.442695
        %v296 = vpow.pop %v295
        %v297 = vmul.f32 %v291, 1.442695
        %v298 = vpow.pop %v297
        %v299 = vmul.f32 %v292, 1.442695
        %v300 = vpow.pop %v299
        %v301 = vsel %vm260, %v294, 0.0
        %v302 = vrot.slane %v301, 4
        %v303 = vadd.f32 %v301, %v302
        %v304 = vrot.slane %v303, 2
        %v305 = vadd.f32 %v303, %v304
        %v306 = vrot.slane %v305, 1
        %v307 = vadd.f32 %v305, %v306
        %v308 = vsel %vm260, %v296, 0.0
        %v309 = vrot.slane %v308, 4
        %v310 = vadd.f32 %v308, %v309
        %v311 = vrot.slane %v310, 2
        %v312 = vadd.f32 %v310, %v311
        %v313 = vrot.slane %v312, 1
        %v314 = vadd.f32 %v312, %v313
        %v315 = vsel %vm260, %v298, 0.0
        %v316 = vrot.slane %v315, 4
        %v317 = vadd.f32 %v315, %v316
        %v318 = vrot.slane %v317, 2
        %v319 = vadd.f32 %v317, %v318
        %v320 = vrot.slane %v319, 1
        %v321 = vadd.f32 %v319, %v320
        %v322 = vsel %vm260, %v300, 0.0
        %v323 = vrot.slane %v322, 4
        %v324 = vadd.f32 %v322, %v323
        %v325 = vrot.slane %v324, 2
        %v326 = vadd.f32 %v324, %v325
        %v327 = vrot.slane %v326, 1
        %v328 = vadd.f32 %v326, %v327
        %v329 = vlog2.pop %v307
        %v330 = vmul.f32 %v329, 0.6931472
        %v331 = vlog2.pop %v314
        %v332 = vmul.f32 %v331, 0.6931472
        %v333 = vlog2.pop %v321
        %v334 = vmul.f32 %v333, 0.6931472
        %v335 = vlog2.pop %v328
        %v336 = vmul.f32 %v335, 0.6931472
        %v337 = vadd.f32 %v330, %v267
        %v338 = vadd.f32 %v332, %v274
        %v339 = vadd.f32 %v334, %v281
        %v340 = vadd.f32 %v336, %v288
        %vm341 = vcmp.eq.s32.totalorder %v258, 0
        %vm342 = vcmp.eq.s32.totalorder %v259, 0
        %v343 = vsel %vm341, 1, 0
        %v344 = vsel %vm342, 1, 0
        %v345 = vcvt.s32.f32 %v343
        %v346 = vcvt.s32.f32 %v344
        %v349 = vlaneseq
        %v350 = vshrl.u32 %v349, 7
        %v351 = vsub.s32 0, %v350
        %v352 = vrot.slane %v345, %v351
        %v353 = vlaneseq
        %v354 = vshrl.u32 %v353, 7
        %v355 = vsub.s32 4, %v354
        %v356 = vrot.slane %v345, %v355
        %v357 = vlaneseq
        %v358 = vshrl.u32 %v357, 7
        %v359 = vsub.s32 0, %v358
        %v360 = vrot.slane %v346, %v359
        %v361 = vlaneseq
        %v362 = vshrl.u32 %v361, 7
        %v363 = vsub.s32 4, %v362
        %v364 = vrot.slane %v346, %v363
        %v369 = vmul.f32 %v252, %v352
        %v370 = vmul.f32 %v253, %v356
        %v371 = vmul.f32 %v254, %v360
        %v372 = vmul.f32 %v255, %v364
        %v373 = vadd.f32 %v369, 0.0
        %v374 = vadd.f32 %v370, 0.0
        %v375 = vadd.f32 %v371, 0.0
        %v376 = vadd.f32 %v372, 0.0
        %v377 = vadd.f32 %v345, 0.0
        %v378 = vadd.f32 %v346, 0.0
        %vm379 = vcmp.eq.s32.totalorder %v258, 1
        %vm380 = vcmp.eq.s32.totalorder %v259, 1
        %v381 = vsel %vm379, 1, 0
        %v382 = vsel %vm380, 1, 0
        %v383 = vcvt.s32.f32 %v381
        %v384 = vcvt.s32.f32 %v382
        %v387 = vlaneseq
        %v388 = vshrl.u32 %v387, 7
        %v389 = vsub.s32 0, %v388
        %v390 = vrot.slane %v383, %v389
        %v391 = vlaneseq
        %v392 = vshrl.u32 %v391, 7
        %v393 = vsub.s32 4, %v392
        %v394 = vrot.slane %v383, %v393
        %v395 = vlaneseq
        %v396 = vshrl.u32 %v395, 7
        %v397 = vsub.s32 0, %v396
        %v398 = vrot.slane %v384, %v397
        %v399 = vlaneseq
        %v400 = vshrl.u32 %v399, 7
        %v401 = vsub.s32 4, %v400
        %v402 = vrot.slane %v384, %v401
        %v407 = vmul.f32 %v252, %v390
        %v408 = vmul.f32 %v253, %v394
        %v409 = vmul.f32 %v254, %v398
        %v410 = vmul.f32 %v255, %v402
        %v415 = vrot.slane %v407, 1
        %v416 = vrot.slane %v408, 1
        %v417 = vrot.slane %v409, 1
        %v418 = vrot.slane %v410, 1
        %v423 = vadd.f32 %v373, %v415
        %v424 = vadd.f32 %v374, %v416
        %v425 = vadd.f32 %v375, %v417
        %v426 = vadd.f32 %v376, %v418
        %v427 = vadd.f32 %v377, %v383
        %v428 = vadd.f32 %v378, %v384
        %vm429 = vcmp.eq.s32.totalorder %v258, 2
        %vm430 = vcmp.eq.s32.totalorder %v259, 2
        %v431 = vsel %vm429, 1, 0
        %v432 = vsel %vm430, 1, 0
        %v433 = vcvt.s32.f32 %v431
        %v434 = vcvt.s32.f32 %v432
        %v437 = vlaneseq
        %v438 = vshrl.u32 %v437, 7
        %v439 = vsub.s32 0, %v438
        %v440 = vrot.slane %v433, %v439
        %v441 = vlaneseq
        %v442 = vshrl.u32 %v441, 7
        %v443 = vsub.s32 4, %v442
        %v444 = vrot.slane %v433, %v443
        %v445 = vlaneseq
        %v446 = vshrl.u32 %v445, 7
        %v447 = vsub.s32 0, %v446
        %v448 = vrot.slane %v434, %v447
        %v449 = vlaneseq
        %v450 = vshrl.u32 %v449, 7
        %v451 = vsub.s32 4, %v450
        %v452 = vrot.slane %v434, %v451
        %v457 = vmul.f32 %v252, %v440
        %v458 = vmul.f32 %v253, %v444
        %v459 = vmul.f32 %v254, %v448
        %v460 = vmul.f32 %v255, %v452
        %v465 = vrot.slane %v457, 2
        %v466 = vrot.slane %v458, 2
        %v467 = vrot.slane %v459, 2
        %v468 = vrot.slane %v460, 2
        %v473 = vadd.f32 %v423, %v465
        %v474 = vadd.f32 %v424, %v466
        %v475 = vadd.f32 %v425, %v467
        %v476 = vadd.f32 %v426, %v468
        %v477 = vmul.f32 %v433, 2.0
        %v478 = vmul.f32 %v434, 2.0
        %v479 = vadd.f32 %v427, %v477
        %v480 = vadd.f32 %v428, %v478
        %vm481 = vcmp.eq.s32.totalorder %v258, 3
        %vm482 = vcmp.eq.s32.totalorder %v259, 3
        %v483 = vsel %vm481, 1, 0
        %v484 = vsel %vm482, 1, 0
        %v485 = vcvt.s32.f32 %v483
        %v486 = vcvt.s32.f32 %v484
        %v489 = vlaneseq
        %v490 = vshrl.u32 %v489, 7
        %v491 = vsub.s32 0, %v490
        %v492 = vrot.slane %v485, %v491
        %v493 = vlaneseq
        %v494 = vshrl.u32 %v493, 7
        %v495 = vsub.s32 4, %v494
        %v496 = vrot.slane %v485, %v495
        %v497 = vlaneseq
        %v498 = vshrl.u32 %v497, 7
        %v499 = vsub.s32 0, %v498
        %v500 = vrot.slane %v486, %v499
        %v501 = vlaneseq
        %v502 = vshrl.u32 %v501, 7
        %v503 = vsub.s32 4, %v502
        %v504 = vrot.slane %v486, %v503
        %v509 = vmul.f32 %v252, %v492
        %v510 = vmul.f32 %v253, %v496
        %v511 = vmul.f32 %v254, %v500
        %v512 = vmul.f32 %v255, %v504
        %v517 = vrot.slane %v509, 3
        %v518 = vrot.slane %v510, 3
        %v519 = vrot.slane %v511, 3
        %v520 = vrot.slane %v512, 3
        %v525 = vadd.f32 %v473, %v517
        %v526 = vadd.f32 %v474, %v518
        %v527 = vadd.f32 %v475, %v519
        %v528 = vadd.f32 %v476, %v520
        %v529 = vmul.f32 %v485, 5.0
        %v530 = vmul.f32 %v486, 5.0
        %v531 = vadd.f32 %v479, %v529
        %v532 = vadd.f32 %v480, %v530
        %vm533 = vcmp.eq.s32.totalorder %v258, 4
        %vm534 = vcmp.eq.s32.totalorder %v259, 4
        %v535 = vsel %vm533, 1, 0
        %v536 = vsel %vm534, 1, 0
        %v537 = vcvt.s32.f32 %v535
        %v538 = vcvt.s32.f32 %v536
        %v541 = vlaneseq
        %v542 = vshrl.u32 %v541, 7
        %v543 = vsub.s32 0, %v542
        %v544 = vrot.slane %v537, %v543
        %v545 = vlaneseq
        %v546 = vshrl.u32 %v545, 7
        %v547 = vsub.s32 4, %v546
        %v548 = vrot.slane %v537, %v547
        %v549 = vlaneseq
        %v550 = vshrl.u32 %v549, 7
        %v551 = vsub.s32 0, %v550
        %v552 = vrot.slane %v538, %v551
        %v553 = vlaneseq
        %v554 = vshrl.u32 %v553, 7
        %v555 = vsub.s32 4, %v554
        %v556 = vrot.slane %v538, %v555
        %v561 = vmul.f32 %v252, %v544
        %v562 = vmul.f32 %v253, %v548
        %v563 = vmul.f32 %v254, %v552
        %v564 = vmul.f32 %v255, %v556
        %v569 = vrot.slane %v561, 4
        %v570 = vrot.slane %v562, 4
        %v571 = vrot.slane %v563, 4
        %v572 = vrot.slane %v564, 4
        %v577 = vadd.f32 %v525, %v569
        %v578 = vadd.f32 %v526, %v570
        %v579 = vadd.f32 %v527, %v571
        %v580 = vadd.f32 %v528, %v572
        %v581 = vmul.f32 %v537, 10.0
        %v582 = vmul.f32 %v538, 10.0
        %v583 = vadd.f32 %v531, %v581
        %v584 = vadd.f32 %v532, %v582
        %vm585 = vcmp.eq.s32.totalorder %v258, 5
        %vm586 = vcmp.eq.s32.totalorder %v259, 5
        %v587 = vsel %vm585, 1, 0
        %v588 = vsel %vm586, 1, 0
        %v589 = vcvt.s32.f32 %v587
        %v590 = vcvt.s32.f32 %v588
        %v593 = vlaneseq
        %v594 = vshrl.u32 %v593, 7
        %v595 = vsub.s32 0, %v594
        %v596 = vrot.slane %v589, %v595
        %v597 = vlaneseq
        %v598 = vshrl.u32 %v597, 7
        %v599 = vsub.s32 4, %v598
        %v600 = vrot.slane %v589, %v599
        %v601 = vlaneseq
        %v602 = vshrl.u32 %v601, 7
        %v603 = vsub.s32 0, %v602
        %v604 = vrot.slane %v590, %v603
        %v605 = vlaneseq
        %v606 = vshrl.u32 %v605, 7
        %v607 = vsub.s32 4, %v606
        %v608 = vrot.slane %v590, %v607
        %v613 = vmul.f32 %v252, %v596
        %v614 = vmul.f32 %v253, %v600
        %v615 = vmul.f32 %v254, %v604
        %v616 = vmul.f32 %v255, %v608
        %v621 = vrot.slane %v613, 5
        %v622 = vrot.slane %v614, 5
        %v623 = vrot.slane %v615, 5
        %v624 = vrot.slane %v616, 5
        %v629 = vadd.f32 %v577, %v621
        %v630 = vadd.f32 %v578, %v622
        %v631 = vadd.f32 %v579, %v623
        %v632 = vadd.f32 %v580, %v624
        %v633 = vmul.f32 %v589, 30.0
        %v634 = vmul.f32 %v590, 30.0
        %v635 = vadd.f32 %v583, %v633
        %v636 = vadd.f32 %v584, %v634
        %s637 = scvt.s32.f32 %s20
        %s638 = smul.f32 %s637, 0.1
        %s639 = sadd.f32 %s638, 1.0
        %v640 = vsub.f32 %v337, %v629
        %v641 = vsub.f32 %v338, %v630
        %v642 = vsub.f32 %v339, %v631
        %v643 = vsub.f32 %v340, %v632
        %v646 = vlaneseq
        %v647 = vshrl.u32 %v646, 7
        %v648 = vsub.s32 0, %v647
        %v649 = vrot.slane %v635, %v648
        %v650 = vlaneseq
        %v651 = vshrl.u32 %v650, 7
        %v652 = vsub.s32 4, %v651
        %v653 = vrot.slane %v635, %v652
        %v654 = vlaneseq
        %v655 = vshrl.u32 %v654, 7
        %v656 = vsub.s32 0, %v655
        %v657 = vrot.slane %v636, %v656
        %v658 = vlaneseq
        %v659 = vshrl.u32 %v658, 7
        %v660 = vsub.s32 4, %v659
        %v661 = vrot.slane %v636, %v660
        %v666 = vmul.f32 %v640, %v649
        %v667 = vmul.f32 %v641, %v653
        %v668 = vmul.f32 %v642, %v657
        %v669 = vmul.f32 %v643, %v661
        %v670 = vld [vmem:[#allocation2] sm:$0x3]
        %vm671 = vcmask 1040384
        %v672 = vsel %vm671, %v666, 0.0
        %v673 = vsel %vm671, %v668, 0.0
        %v674 = vadd.f32 %v672, %v673
        %v675 = vsel %vm671, %v667, 0.0
        %v676 = vsel %vm671, %v669, 0.0
        %v677 = vadd.f32 %v675, %v676
        %v678 = vstv %s639
        %v679 = vmul.f32 %v674, %v678
        %v680 = vmul.f32 %v677, %v678
        %v683 = vcombine.low %v679, %v680
        %v685 = vunpack.c.l.s4 1966171168
        %v686 = vunpack.c.0.s8 %v685
        %v687 = vlaneseq
        %v688 = vshrl.u32 %v687, 7
        %v689 = vsub.s32 %v686, %v688
        %v690 = vrot.slane %v683, %v689
        %v692 = vunpack.c.l.s4 1966171168
        %v693 = vunpack.c.0.s8 %v692
        %v694 = vlaneseq
        %v695 = vshrl.u32 %v694, 7
        %v696 = vsub.s32 %v693, %v695
        %v697 = vrot.slane %v690, %v696
        %v699 = vadd.f32 %v670, %v697
        %v700 = vlaneseq
        %vm701 = vcmp.ge.s32.totalorder %v700, 0
        %vm702 = vcmp.lt.s32.totalorder %v700, 256
        %vm703 = vmand %vm701, %vm702
        %704 = vst.msk [vmem:[#allocation2] sm:$0x3] %vm703, %v699
        // Predicated region
        $region33: #{tpu_custom_call.1} parent=27 // pred_check
          %p705 = pneg %p111
        $region34: #{tpu_custom_call.1} parent=27 // pred_check_branch
          %707 = sbr.rel (%p705) target = $region36
        $region35: #{tpu_custom_call.1} parent=27 // pred_region
          %s709 = ssub.s32 32, 32
          %710 = vsyncadd [#allocation3], %s709
          %s711 = smul.addr %s19, 2
          %s712 = smul.addr %s711, 16
          %s713 = scalar_lea.hbm %s2, %s712
          %s715 = sshll.u32 [#allocation2], 4
          %s716 = int_to_ptr.vmem [resolvable:$true] %s715
          %718 = dma.vmem_to_hbm [thread:$0]  %s716, 32, %s713, [#allocation3]
        $region36: #{tpu_custom_call.1} parent=27 // pred_fallthru
          _
        // Predicated region
        $region37: #{tpu_custom_call.1} parent=27 // pred_check
          %p719 = pneg %p111
        $region38: #{tpu_custom_call.1} parent=27 // pred_check_branch
          %721 = sbr.rel (%p719) target = $region40
        $region39: #{tpu_custom_call.1} parent=27 // pred_region
          %722 = dma.done [#allocation3], 32
        $region40: #{tpu_custom_call.1} parent=27 // pred_fallthru
          _
      $region28: #{tpu_custom_call.1} parent=5 // pred_fallthru
        _
      %p723 = scmp.le.s32.totalorder 2, %s9
      // Predicated region
      $region41: #{tpu_custom_call.1} parent=5 // pred_check
        %p724 = pneg %p723
      $region42: #{tpu_custom_call.1} parent=5 // pred_check_branch
        %726 = sbr.rel (%p724) target = $region44
      $region43: #{tpu_custom_call.1} parent=5 // pred_region
        %s727 = ssub.s32 %s9, 2
      $region44: #{tpu_custom_call.1} parent=5 // pred_fallthru
        _
    $region6: #{tpu_custom_call.1} parent=1 // loop_footer
      %s13 = sadd.s32 1, %s9
    $region7: #{tpu_custom_call.1} parent=1 // loop_footer_branch
      %8 = sbr.rel target = $region3
    $region8: #{tpu_custom_call.1} parent=1 // loop_exit
      _
    %728 = vsyncpa [#allocation3], 1
    %s729 = scalar_lea.sflag [#allocation3], 1
    %730 = vsyncpa %s729, 1

</llo_original>
